<compile_context>
chip_gen: v5e
topology: v5e:2x2
jax: 0.10.0
libtpu: 0.0.40
codegen_flags: <defaults>
</compile_context>

<pallas_src>
import functools
import math

import jax
import jax.numpy as jnp
from jax import lax
from jax.experimental import pallas as pl
from jax.experimental.pallas import tpu as pltpu

LN_EPS = 1e-5

_VMEM_TILE_BUDGET = 24 << 20          # bytes for the 4 double-buffered tiles
_VMEM_LIMIT_BYTES = 32 << 20          # scoped-VMEM limit passed to Mosaic
_TARGET_BLOCK_ROWS = 4096             # sweep-informed default row tile


# ------------------------------ Pallas kernel --------------------------------
def _layernorm_kernel(*refs, eps, has_bias):
    """LayerNorm over the last dim of a (rows, D) tile. Matches F.layer_norm."""
    if has_bias:
        x_ref, w_ref, b_ref, o_ref = refs
    else:
        x_ref, w_ref, o_ref = refs
        b_ref = None

    x = x_ref[...].astype(jnp.float32)                      # (TR, D)
    inv_d = 1.0 / x.shape[-1]

    # Two-pass biased statistics: numerically safe (no E[x^2]-mu^2 cancellation,
    # variance is a sum of squares so it is never negative).
    mu = jnp.sum(x, axis=-1, keepdims=True) * inv_d
    xc = x - mu
    var = jnp.sum(xc * xc, axis=-1, keepdims=True) * inv_d

    inv_std = lax.rsqrt(var + eps)                          # EUP, not VALU divide
    y = xc * inv_std * w_ref[...].astype(jnp.float32)       # w broadcast over rows
    if has_bias:
        y = y + b_ref[...].astype(jnp.float32)

    o_ref[...] = y.astype(o_ref.dtype)


# --------------------------------- wrapper ------------------------------------
def _pick_block_rows(rows, D, dtype_bytes, requested):
    """Choose a row tile: large (HBM-streaming) but VMEM-safe, sublane-aligned."""
    # Sublane packing: f32 -> 8 rows/vreg, bf16 -> 16, int8/fp8 -> 32.
    sub = {4: 8, 2: 16, 1: 32}.get(dtype_bytes, 8)

    if requested is None:
        # 2 input buffers + 2 output buffers of (block_rows, D) must fit budget.
        max_rows_by_vmem = max(sub, _VMEM_TILE_BUDGET // (4 * D * dtype_bytes))
        requested = min(_TARGET_BLOCK_ROWS, max_rows_by_vmem)

    block_rows = max(sub, (requested // sub) * sub)
    if rows <= block_rows:
        # Full-extent block along rows: always layout-legal, single grid step.
        block_rows = rows
    return block_rows


def gpt_layer_norm(x, weight, bias=None, *, eps=LN_EPS, block_rows=None):
    """GPTLayerNorm.forward: layer_norm over the last dim with optional bias."""
    orig_shape = x.shape
    D = orig_shape[-1]
    rows = int(math.prod(orig_shape[:-1])) if len(orig_shape) > 1 else 1
    dtype_bytes = jnp.dtype(x.dtype).itemsize

    x2 = x.reshape(rows, D)
    w2 = weight.reshape(1, D)
    has_bias = bias is not None

    block_rows = _pick_block_rows(rows, D, dtype_bytes, block_rows)
    grid = (pl.cdiv(rows, block_rows),)     # partial last block is masked by Pallas

    args = [x2, w2]
    in_specs = [
        pl.BlockSpec((block_rows, D), lambda i: (i, 0)),
        pl.BlockSpec((1, D), lambda i: (0, 0)),
    ]
    if has_bias:
        args.append(bias.reshape(1, D))
        in_specs.append(pl.BlockSpec((1, D), lambda i: (0, 0)))

    cost = pl.CostEstimate(
        flops=8 * rows * D,                                # stats + affine epilogue
        transcendentals=rows,                              # one rsqrt per row
        bytes_accessed=2 * rows * D * dtype_bytes          # x in + y out
        + 2 * D * dtype_bytes,                             # weight (+bias)
    )

    out = pl.pallas_call(
        functools.partial(_layernorm_kernel, eps=eps, has_bias=has_bias),
        out_shape=jax.ShapeDtypeStruct((rows, D), x.dtype),
        grid=grid,
        in_specs=in_specs,
        out_specs=pl.BlockSpec((block_rows, D), lambda i: (i, 0)),
        compiler_params=pltpu.CompilerParams(
            dimension_semantics=("parallel",),             # v7x: split rows over TCs
            vmem_limit_bytes=_VMEM_LIMIT_BYTES,            # v5e default is only 16 MiB
        ),
        cost_estimate=cost,
    )(*args)
    return out.reshape(orig_shape)


# ----------------------------- pure-JAX reference ------------------------------
def ref_layer_norm(x, weight, bias=None, eps=LN_EPS):
    xf = x.astype(jnp.float32)
    mu = jnp.mean(xf, axis=-1, keepdims=True)
    var = jnp.mean((xf - mu) ** 2, axis=-1, keepdims=True)   # biased, like PyTorch
    y = (xf - mu) / jnp.sqrt(var + eps) * weight.astype(jnp.float32)
    if bias is not None:
        y = y + bias.astype(jnp.float32)
    return y.astype(x.dtype)


# ------------------------------------ main -------------------------------------
if __name__ == "__main__":
    # Small shapes consistent with a GPT block input: (batch=2, seq=8, ndim=128).
    # ndim=128 keeps the lane dim dense (full vregs, no masked stores).
    B, S, D = 2, 8, 128

    key = jax.random.PRNGKey(0)
    kx, kw, kb = jax.random.split(key, 3)
    x = jax.random.normal(kx, (B, S, D), jnp.float32)
    # Module initializes weight=ones / bias=zeros; perturb so the affine path
    # is actually exercised.
    weight = 1.0 + 0.1 * jax.random.normal(kw, (D,), jnp.float32)
    bias = 0.1 * jax.random.normal(kb, (D,), jnp.float32)

    # bias=True variant.
    y = jax.block_until_ready(gpt_layer_norm(x, weight, bias))
    assert y.shape == x.shape, y.shape
    y_ref = ref_layer_norm(x, weight, bias)
    assert jnp.allclose(y, y_ref, rtol=1e-5, atol=1e-5), (
        float(jnp.max(jnp.abs(y - y_ref))))

    # bias=False variant (GPTLayerNorm(ndim, bias=False): self.bias is None).
    y_nb = jax.block_until_ready(gpt_layer_norm(x, weight, None))
    y_nb_ref = ref_layer_norm(x, weight, None)
    assert jnp.allclose(y_nb, y_nb_ref, rtol=1e-5, atol=1e-5), (
        float(jnp.max(jnp.abs(y_nb - y_nb_ref))))

    # Uneven rows (3*5=15) with a forced small tile: exercises the cdiv grid
    # with a masked partial last block (replaces the old giant-block fallback).
    x_odd = jax.random.normal(jax.random.PRNGKey(1), (3, 5, D), jnp.float32)
    y_odd = jax.block_until_ready(gpt_layer_norm(x_odd, weight, bias, block_rows=8))
    assert jnp.allclose(y_odd, ref_layer_norm(x_odd, weight, bias),
                        rtol=1e-5, atol=1e-5)

    # bf16 I/O path (f32 internal math): halves HBM bytes when the model is bf16.
    x_bf = x.astype(jnp.bfloat16)
    y_bf = jax.block_until_ready(
        gpt_layer_norm(x_bf, weight.astype(jnp.bfloat16), bias.astype(jnp.bfloat16)))
    assert y_bf.dtype == jnp.bfloat16
    assert jnp.allclose(y_bf.astype(jnp.float32), y_ref, rtol=3e-2, atol=3e-2)

    print("KERNEL_OK")
</pallas_src>

<mosaic_0001>
module attributes {stable_mosaic.version = 11 : i64} {
  func.func @_layernorm_kernel(%arg0: i32, %arg1: memref<16x128xf32, #tpu.memory_space<vmem>>, %arg2: memref<1x128xf32, #tpu.memory_space<vmem>>, %arg3: memref<1x128xf32, #tpu.memory_space<vmem>>, %arg4: memref<16x128xf32, #tpu.memory_space<vmem>>) attributes {dimension_semantics = [#tpu.dimension_semantics<parallel>], iteration_bounds = array<i64: 1>, scalar_prefetch = 0 : i64, scratch_operands = 0 : i64, tpu.core_type = #tpu.core_type<tc>, window_params = [{transform_indices = @transform_0, window_bounds = array<i64: 16, 128>}, {pipeline_mode = #tpu.pipeline_mode<synchronous>, transform_indices = @transform_1, window_bounds = array<i64: 1, 128>}, {pipeline_mode = #tpu.pipeline_mode<synchronous>, transform_indices = @transform_2, window_bounds = array<i64: 1, 128>}, {transform_indices = @transform_3, window_bounds = array<i64: 16, 128>}]} {
    %c0 = arith.constant 0 : index
    %c0_0 = arith.constant 0 : index
    %0 = vector.load %arg1[%c0, %c0_0] : memref<16x128xf32, #tpu.memory_space<vmem>>, vector<16x128xf32>
    %cst = arith.constant dense<0.000000e+00> : vector<16xf32>
    %1 = vector.multi_reduction <add>, %0, %cst [1] : vector<16x128xf32> to vector<16xf32>
    %2 = vector.shape_cast %1 : vector<16xf32> to vector<16x1xf32>
    %cst_1 = arith.constant 7.812500e-03 : f32
    %3 = vector.broadcast %cst_1 : f32 to vector<16x1xf32>
    %4 = arith.mulf %2, %3 : vector<16x1xf32>
    %5 = vector.broadcast %4 : vector<16x1xf32> to vector<16x128xf32>
    %6 = arith.subf %0, %5 : vector<16x128xf32>
    %7 = arith.mulf %6, %6 : vector<16x128xf32>
    %cst_2 = arith.constant dense<0.000000e+00> : vector<16xf32>
    %8 = vector.multi_reduction <add>, %7, %cst_2 [1] : vector<16x128xf32> to vector<16xf32>
    %9 = vector.shape_cast %8 : vector<16xf32> to vector<16x1xf32>
    %cst_3 = arith.constant 7.812500e-03 : f32
    %10 = vector.broadcast %cst_3 : f32 to vector<16x1xf32>
    %11 = arith.mulf %9, %10 : vector<16x1xf32>
    %cst_4 = arith.constant 9.99999974E-6 : f32
    %12 = vector.broadcast %cst_4 : f32 to vector<16x1xf32>
    %13 = arith.addf %11, %12 : vector<16x1xf32>
    %14 = math.rsqrt %13 : vector<16x1xf32>
    %15 = vector.broadcast %14 : vector<16x1xf32> to vector<16x128xf32>
    %16 = arith.mulf %6, %15 : vector<16x128xf32>
    %c0_5 = arith.constant 0 : index
    %c0_6 = arith.constant 0 : index
    %17 = vector.load %arg2[%c0_5, %c0_6] : memref<1x128xf32, #tpu.memory_space<vmem>>, vector<1x128xf32>
    %18 = vector.broadcast %17 : vector<1x128xf32> to vector<16x128xf32>
    %19 = arith.mulf %16, %18 : vector<16x128xf32>
    %c0_7 = arith.constant 0 : index
    %c0_8 = arith.constant 0 : index
    %20 = vector.load %arg3[%c0_7, %c0_8] : memref<1x128xf32, #tpu.memory_space<vmem>>, vector<1x128xf32>
    %21 = vector.broadcast %20 : vector<1x128xf32> to vector<16x128xf32>
    %22 = arith.addf %19, %21 : vector<16x128xf32>
    %c0_9 = arith.constant 0 : index
    %c0_10 = arith.constant 0 : index
    %23 = vector.load %arg4[%c0_9, %c0_10] : memref<16x128xf32, #tpu.memory_space<vmem>>, vector<16x128xf32>
    tpu.vector_store %arg4[%c0_9, %c0_10], %22 {strides = array<i32>} : memref<16x128xf32, #tpu.memory_space<vmem>>, vector<16x128xf32>,
    return
  }
  func.func @transform_0(%arg0: i32) -> (i32, i32) {
    %c0_i32 = arith.constant 0 : i32
    %c0_i32_0 = arith.constant 0 : i32
    return %arg0, %c0_i32 : i32, i32
  }
  func.func @transform_1(%arg0: i32) -> (i32, i32) {
    %c0_i32 = arith.constant 0 : i32
    %c0_i32_0 = arith.constant 0 : i32
    %c0_i32_1 = arith.constant 0 : i32
    return %c0_i32, %c0_i32_0 : i32, i32
  }
  func.func @transform_2(%arg0: i32) -> (i32, i32) {
    %c0_i32 = arith.constant 0 : i32
    %c0_i32_0 = arith.constant 0 : i32
    %c0_i32_1 = arith.constant 0 : i32
    return %c0_i32, %c0_i32_0 : i32, i32
  }
  func.func @transform_3(%arg0: i32) -> (i32, i32) {
    %c0_i32 = arith.constant 0 : i32
    %c0_i32_0 = arith.constant 0 : i32
    return %arg0, %c0_i32 : i32, i32
  }
}

</mosaic_0001>

<llo_original>
// kernel: tpu_custom_call.1
$region0: #{tpu_custom_call.1}
  #allocation0 [shape = 'u32[]', space=smem, size = 0x4, offset = 0x4, fixed_abs, tag = 'smem constant byte address 0x4 - core index']
  #allocation1 [shape = 'u32[72,128]{1,0:T(1,128)}', space=vmem, size = 0x9000, scoped, tag = 'internal scratch']
  %s0 = inlined_call_operand.hbm [shape: f32[16,128], index: 0, kind: input, shape index: {}]
  %s1 = inlined_call_operand.hbm [shape: f32[1,128], index: 1, kind: input, shape index: {}]
  %s2 = inlined_call_operand.vmem [shape: f32[1,128], index: 2, kind: input, shape index: {}]
  %s3 = inlined_call_operand.hbm [shape: f32[16,128], index: 3, kind: output, shape index: {}]
  %s4 = sld [smem:[#allocation0]]
  $region30: #{tpu_custom_call.1} parent=0
    _
  %s6 = ssub.s32 1, %s4
  %s7 = scalar_select 0, %s6, %s4
  $region1: #{tpu_custom_call.1} parent=0
    #allocation2 [shape = 'u8[8192]{0}', space=vmem, size = 0x2000, scoped, tag = 'input window, operand 0, single buffered']
    #allocation3 [shape = 's32[1]{0}', space=sflag, size = 0x4, scoped, tag = 'scoped memory for tpu_custom_call.1']
    #allocation4 [shape = 's32[1]{0}', space=sflag, size = 0x4, scoped, tag = 'scoped memory for tpu_custom_call.1']
    #allocation5 [shape = 'u8[512]{0}', space=vmem, size = 0x400, scoped, tag = 'input window, operand 1, single buffered']
    #allocation6 [shape = 's32[1]{0}', space=sflag, size = 0x4, scoped, tag = 'scoped memory for tpu_custom_call.1']
    #allocation7 [shape = 'u8[8192]{0}', space=vmem, size = 0x2000, scoped, tag = 'output window, operand 0, single buffered']
    %8 = vsyncpa [#allocation3], 0
    %9 = vsyncpa [#allocation6], 0
    %10 = vsyncpa [#allocation4], 0
    // Predicated region
    $region2: #{tpu_custom_call.1} parent=1 // pred_check
      _
    $region3: #{tpu_custom_call.1} parent=1 // pred_check_branch
      %12 = sbr.rel (0) target = $region5
    $region4: #{tpu_custom_call.1} parent=1 // pred_region
      %14 = vsyncadd [#allocation3], 0
      %s15 = sshll.u32 %s0, 4
      %s16 = int_to_ptr.hbm [resolvable:$true] %s15
      %s17 = sshll.u32 [#allocation2], 4
      %s18 = int_to_ptr.vmem [resolvable:$true] %s17
      %23 = dma.hbm_to_vmem [thread:$0]  %s16, 256, %s18, [#allocation3], 128, 128, 8
    $region5: #{tpu_custom_call.1} parent=1 // pred_fallthru
      _
    // Predicated region
    $region6: #{tpu_custom_call.1} parent=1 // pred_check
      _
    $region7: #{tpu_custom_call.1} parent=1 // pred_check_branch
      %25 = sbr.rel (0) target = $region9
    $region8: #{tpu_custom_call.1} parent=1 // pred_region
      %27 = vsyncadd [#allocation6], 0
      %s29 = sshll.u32 %s1, 4
      %s30 = int_to_ptr.hbm [resolvable:$true] %s29
      %s31 = sshll.u32 [#allocation5], 4
      %s32 = int_to_ptr.vmem [resolvable:$true] %s31
      %34 = dma.hbm_to_vmem [thread:$0]  %s30, 16, %s32, [#allocation6]
    $region9: #{tpu_custom_call.1} parent=1 // pred_fallthru
      _
    // Predicated region
    $region10: #{tpu_custom_call.1} parent=1 // pred_check
      _
    $region11: #{tpu_custom_call.1} parent=1 // pred_check_branch
      %36 = sbr.rel (0) target = $region13
    $region12: #{tpu_custom_call.1} parent=1 // pred_region
      _
    $region13: #{tpu_custom_call.1} parent=1 // pred_fallthru
      _
    // Predicated region
    $region14: #{tpu_custom_call.1} parent=1 // pred_check
      _
    $region15: #{tpu_custom_call.1} parent=1 // pred_check_branch
      %38 = sbr.rel (0) target = $region17
    $region16: #{tpu_custom_call.1} parent=1 // pred_region
      %40 = dma.done [#allocation3], 256
    $region17: #{tpu_custom_call.1} parent=1 // pred_fallthru
      _
    // Predicated region
    $region18: #{tpu_custom_call.1} parent=1 // pred_check
      _
    $region19: #{tpu_custom_call.1} parent=1 // pred_check_branch
      %42 = sbr.rel (0) target = $region21
    $region20: #{tpu_custom_call.1} parent=1 // pred_region
      %44 = dma.done [#allocation6], 16
    $region21: #{tpu_custom_call.1} parent=1 // pred_fallthru
      _
    %v45 = vld [vmem:[#allocation2] sm:$0xff]
    %v46 = vld [vmem:[#allocation2 + $0x8] sm:$0xff]
    %47 = vadd.xlane.f32.xlu0 %v45
    %v48 = vpop.xlane.xlu0 %47
    %49 = vadd.xlane.f32.xlu0 %v46
    %v50 = vpop.xlane.xlu0 %49
    %v51 = vmul.f32 %v48, 0.0078125
    %v52 = vmul.f32 %v50, 0.0078125
    %v53 = vsub.f32 %v45, %v51
    %v54 = vsub.f32 %v46, %v52
    %v55 = vmul.f32 %v53, %v53
    %v56 = vmul.f32 %v54, %v54
    %57 = vadd.xlane.f32.xlu0 %v55
    %v58 = vpop.xlane.xlu0 %57
    %59 = vadd.xlane.f32.xlu0 %v56
    %v60 = vpop.xlane.xlu0 %59
    %v61 = vmul.f32 %v58, 0.0078125
    %v62 = vmul.f32 %v60, 0.0078125
    %v63 = vadd.f32 %v61, 1e-05
    %v64 = vadd.f32 %v62, 1e-05
    %v65 = vrsqrt.pop %v63
    %v66 = vmul.f32 %v65, %v63
    %v67 = vmul.f32 %v66, %v65
    %v68 = vmul.f32 0.5, %v67
    %v69 = vsub.f32 1.5, %v68
    %v70 = vmul.f32 %v65, %v69
    %vm71 = vweird.f32 %v63
    %vm72 = vweird.f32 %v65
    %vm73 = vmor %vm71, %vm72
    %v74 = vsel %vm73, %v65, %v70
    %v75 = vrsqrt.pop %v64
    %v76 = vmul.f32 %v75, %v64
    %v77 = vmul.f32 %v76, %v75
    %v78 = vmul.f32 0.5, %v77
    %v79 = vsub.f32 1.5, %v78
    %v80 = vmul.f32 %v75, %v79
    %vm81 = vweird.f32 %v64
    %vm82 = vweird.f32 %v75
    %vm83 = vmor %vm81, %vm82
    %v84 = vsel %vm83, %v75, %v80
    %v85 = vmul.f32 %v53, %v74
    %v86 = vmul.f32 %v54, %v84
    %v87 = vld [vmem:[#allocation5] sm:$0x1]
    %v89 = vperm.slane %v87, 0
    %v91 = vmul.f32 %v85, %v89
    %v92 = vmul.f32 %v86, %v89
    %v93 = vld [vmem:[%s2] sm:$0x1]
    %v95 = vperm.slane %v93, 0
    %v97 = vadd.f32 %v91, %v95
    %v98 = vadd.f32 %v92, %v95
    %99 = vst [vmem:[#allocation7] sm:$0xff] %v97
    %100 = vst [vmem:[#allocation7 + $0x8] sm:$0xff] %v98
    // Predicated region
    $region22: #{tpu_custom_call.1} parent=1 // pred_check
      _
    $region23: #{tpu_custom_call.1} parent=1 // pred_check_branch
      %102 = sbr.rel (0) target = $region25
    $region24: #{tpu_custom_call.1} parent=1 // pred_region
      %104 = vsyncadd [#allocation4], 0
      %s105 = sshll.u32 [#allocation7], 4
      %s106 = int_to_ptr.vmem [resolvable:$true] %s105
      %s107 = sshll.u32 %s3, 4
      %s108 = int_to_ptr.hbm [resolvable:$true] %s107
      %113 = dma.vmem_to_hbm [thread:$0]  %s106, 256, %s108, [#allocation4], 128, 128, 8
    $region25: #{tpu_custom_call.1} parent=1 // pred_fallthru
      _
    // Predicated region
    $region26: #{tpu_custom_call.1} parent=1 // pred_check
      _
    $region27: #{tpu_custom_call.1} parent=1 // pred_check_branch
      %115 = sbr.rel (0) target = $region29
    $region28: #{tpu_custom_call.1} parent=1 // pred_region
      %117 = dma.done [#allocation4], 256
    $region29: #{tpu_custom_call.1} parent=1 // pred_fallthru
      _
    %118 = vsyncpa [#allocation3], 1
    %119 = vsyncpa [#allocation6], 1
    %120 = vsyncpa [#allocation4], 1

</llo_original>
